<compile_context>
chip_gen: v5e
topology: v5e:2x2
jax: 0.10.0
libtpu: 0.0.40
codegen_flags: <defaults>
</compile_context>

<pallas_src>
import functools

import numpy as np
import jax
import jax.numpy as jnp
from jax import lax
from jax.experimental import pallas as pl
from jax.experimental.pallas import tpu as pltpu

_EPS = 1e-5
_OFF = 8                      # sublane-aligned start of image rows inside scratches
_VMEM_BUDGET = 24 * (1 << 20)  # per-step footprint target; leaves headroom in v7x's
                               # 64 MiB VMEM (and far more on v5e/v6e's 128 MiB)


# --------------------------------------------------------------------------- kernel

def _basic_block_kernel(*refs, B, R_in, Ho, Kin, F, Wcin, stride, has_proj,
                        want_inter):
    """Fused BasicBlock forward for a tile of B images.

    Activations are row-flattened channels-last tiles; every matmul has
    M = B*Ho rows.  3x3 convs are MXU dots against precomputed band matrices
    (horizontal taps/stride/pad folded in).  For stride>=2 each input row is a
    "super-row" packing `stride` image rows along lanes, so the strided conv is
    two contiguous deep-K dots (no selection matmuls, no strided loads).
    """
    refs = list(refs)
    x_ref = refs.pop(0)                      # (B, R_in, Kin)
    wb1_ref = refs.pop(0)                    # (3 or 2, Kin, F), BN scale folded
    b1_ref = refs.pop(0)                     # (1, F)
    wb2_ref = refs.pop(0)                    # (3, F, F), BN scale folded
    b2_ref = refs.pop(0)                     # (1, F)
    if has_proj:
        wsc_ref = refs.pop(0)                # (Wcin, F), BN scale folded
        bsc_ref = refs.pop(0)                # (1, F)
    if want_inter:
        o1_ref = refs.pop(0)
        o2_ref = refs.pop(0)
    o3_ref = refs.pop(0)
    xp1 = refs.pop(0)
    xp2 = refs.pop(0)

    f32 = jnp.float32

    # ---- stage the vertically zero-padded input rows in VMEM --------------------
    # Only the border row(s) are zeroed (not the whole scratch).  They must be
    # re-written every grid step: the scratch is uninitialized at kernel entry and
    # under "parallel" semantics the second TensorCore never runs grid step 0.
    zk = jnp.zeros((B, 1, Kin), f32)
    xp1[:, _OFF - 1:_OFF, :] = zk
    if stride == 1:
        xp1[:, _OFF + R_in:_OFF + R_in + 1, :] = zk
    xp1[:, _OFF:_OFF + R_in, :] = x_ref[...].astype(f32)   # sublane-aligned store

    # ---- conv1 (3x3, stride s, pad 1) + bn1 (scale pre-folded) + relu -----------
    acc1 = jnp.zeros((B * Ho, F), f32)
    if stride == 1:
        # Three contiguous row windows, one MXU dot per vertical tap.
        win0 = xp1[:, _OFF - 1:_OFF - 1 + Ho, :].reshape(B * Ho, Kin)
        win1 = xp1[:, _OFF:_OFF + Ho, :].reshape(B * Ho, Kin)
        win2 = xp1[:, _OFF + 1:_OFF + 1 + Ho, :].reshape(B * Ho, Kin)
        acc1 = acc1 + jnp.dot(win0, wb1_ref[0], preferred_element_type=f32)
        acc1 = acc1 + jnp.dot(win1, wb1_ref[1], preferred_element_type=f32)
        acc1 = acc1 + jnp.dot(win2, wb1_ref[2], preferred_element_type=f32)
        sc_rows = win1                 # original rows, for a stride-1 projection
    else:
        # Super-row layout: vertical tap kh=0 lives in the previous super-row,
        # taps kh=1,2 in the current one -> two deep-K contiguous dots.
        prev = xp1[:, _OFF - 1:_OFF - 1 + Ho, :].reshape(B * Ho, Kin)
        cur = xp1[:, _OFF:_OFF + Ho, :].reshape(B * Ho, Kin)
        acc1 = acc1 + jnp.dot(prev, wb1_ref[0], preferred_element_type=f32)
        acc1 = acc1 + jnp.dot(cur, wb1_ref[1], preferred_element_type=f32)
        sc_rows = cur[:, :Wcin]        # element 0 of each super-row = rows s*oh
    out1 = jnp.maximum(acc1 + b1_ref[0], 0.0)
    if want_inter:
        o1_ref[...] = out1.reshape(B, Ho, F).astype(o1_ref.dtype)

    # ---- conv2 (3x3, stride 1, pad 1) + bn2 (scale pre-folded) ------------------
    zf = jnp.zeros((B, 1, F), f32)
    xp2[:, _OFF - 1:_OFF, :] = zf
    xp2[:, _OFF + Ho:_OFF + Ho + 1, :] = zf
    xp2[:, _OFF:_OFF + Ho, :] = out1.reshape(B, Ho, F)

    acc2 = jnp.zeros((B * Ho, F), f32)
    for kh in range(3):
        win = xp2[:, _OFF - 1 + kh:_OFF - 1 + kh + Ho, :].reshape(B * Ho, F)
        acc2 = acc2 + jnp.dot(win, wb2_ref[kh], preferred_element_type=f32)
    out2 = acc2 + b2_ref[0]
    if want_inter:
        # NOTE: matches the intent (bn2 output).  In the PyTorch code `out +=
        # shortcut(x)` mutates the tensor aliased into results[id+'1'] in place.
        o2_ref[...] = out2.reshape(B, Ho, F).astype(o2_ref.dtype)

    # ---- shortcut (1x1 conv + bn, or identity) + residual add + relu ------------
    if has_proj:
        sc = jnp.dot(sc_rows, wsc_ref[...], preferred_element_type=f32) + bsc_ref[0]
    else:
        sc = x_ref[...].astype(f32).reshape(B * Ho, F)   # stride==1, Cin==planes
    o3_ref[...] = jnp.maximum(out2 + sc, 0.0).reshape(B, Ho, F).astype(o3_ref.dtype)


# ----------------------------------------------------------------- band construction

def _conv3x3_band(w, w_in, w_out, stride):
    """HWIO (3,3,Ci,Co) -> (3, w_in*Ci, w_out*Co) per-kernel-row band matrices for a
    pad=1 conv; horizontal taps / stride / padding are folded into the bands."""
    kh, kw, ci, co = w.shape
    sel = np.zeros((w_in, kw, w_out), np.float32)
    for ow in range(w_out):
        for k in range(kw):
            wi = ow * stride + k - 1              # pad = 1
            if 0 <= wi < w_in:
                sel[wi, k, ow] = 1.0
    band = jnp.einsum('wko,hkic->hwioc', jnp.asarray(sel), w)
    return band.reshape(kh, w_in * ci, w_out * co)


def _conv3x3_superrow_bands(w, w_img, w_out, stride):
    """HWIO (3,3,Ci,Co) -> two band matrices (prev, cur), each of shape
    (stride*w_img*Ci, w_out*Co), for a pad=1 conv with vertical stride `stride`
    acting on super-rows that pack `stride` image rows along lanes.  Vertical tap
    kh=0 reads element stride-1 of the previous super-row; taps kh=1,2 read
    elements 0,1 of the current one.  Horizontal taps/stride/pad are folded in."""
    kh, kw, ci, co = w.shape
    sel_prev = np.zeros((stride, w_img, kw, w_out), np.float32)
    sel_cur = np.zeros((stride, w_img, kh, kw, w_out), np.float32)
    for ow in range(w_out):
        for k in range(kw):
            wi = ow * stride + k - 1              # pad = 1 (horizontal)
            if not (0 <= wi < w_img):
                continue
            sel_prev[stride - 1, wi, k, ow] = 1.0       # vertical tap kh = 0
            sel_cur[0, wi, 1, k, ow] = 1.0              # vertical tap kh = 1
            sel_cur[1, wi, 2, k, ow] = 1.0              # vertical tap kh = 2
    band_prev = jnp.einsum('ewko,kic->ewioc', jnp.asarray(sel_prev), w[0])
    band_cur = jnp.einsum('ewhko,hkic->ewioc', jnp.asarray(sel_cur), w)
    K, F = stride * w_img * ci, w_out * co
    return band_prev.reshape(K, F), band_cur.reshape(K, F)


def _conv1x1_band(w, w_in, w_out, stride):
    """(Ci,Co) 1x1 weights -> (w_in*Ci, w_out*Co) band with horizontal stride folded."""
    ci, co = w.shape
    sel = np.zeros((w_in, w_out), np.float32)
    for ow in range(w_out):
        sel[ow * stride, ow] = 1.0
    band = jnp.einsum('wo,ic->wioc', jnp.asarray(sel), w)
    return band.reshape(w_in * ci, w_out * co)


def _fold_bn(gamma, beta, mean, var):
    scale = gamma / jnp.sqrt(var + _EPS)
    bias = beta - mean * scale
    return scale, bias


# -------------------------------------------------------------------- VMEM budgeting

def _ru(x, m):
    return -(-x // m) * m


def _step_vmem_bytes(B, R_in, Ho, Kin, F, Wcin, n_b1, has_proj, n_out):
    """Rough per-grid-step VMEM footprint (double-buffered I/O + weights + scratch)."""
    f4 = 4
    lk, lf = _ru(Kin, 128), _ru(F, 128)
    inp = 2 * B * _ru(R_in, 8) * lk * f4
    outs = 2 * n_out * B * _ru(Ho, 8) * lf * f4
    wts = 2 * (n_b1 * _ru(Kin, 8) * lf + 3 * _ru(F, 8) * lf
               + (_ru(Wcin, 8) * lf if has_proj else 0) + 3 * 8 * lf) * f4
    scr = (B * _ru(R_in + _OFF + 1, 8) * lk + B * _ru(Ho + _OFF + 1, 8) * lf) * f4
    live = (6 * lf + 4 * lk) * B * _ru(Ho, 8) * f4   # accumulators / window values
    return inp + outs + wts + scr + live


# --------------------------------------------------------------------------- module

class BasicBlockPallas:
    """Pallas port of BasicBlock.forward (inference-mode BN), fully fused."""

    expansion = 1

    def __init__(self, in_planes, planes, stride=1, iden='na', key=None):
        self.id = iden
        self.stride = stride
        self.in_planes = in_planes
        self.planes = planes
        self.has_proj = (stride != 1) or (in_planes != self.expansion * planes)
        self._band_cache = {}
        key = jax.random.PRNGKey(42) if key is None else key
        ks = jax.random.split(key, 15)

        def bn_params(k0, k1, k2, k3, c):
            gamma = 1.0 + 0.1 * jax.random.normal(k0, (c,), jnp.float32)
            beta = 0.1 * jax.random.normal(k1, (c,), jnp.float32)
            mean = 0.05 * jax.random.normal(k2, (c,), jnp.float32)
            var = 0.5 + jnp.abs(jax.random.normal(k3, (c,), jnp.float32)) * 0.1
            return _fold_bn(gamma, beta, mean, var)

        # conv weights stored HWIO (kh, kw, Cin, Cout)
        self.w1 = 0.1 * jax.random.normal(ks[0], (3, 3, in_planes, planes), jnp.float32)
        self.s1, self.b1 = bn_params(ks[1], ks[2], ks[3], ks[4], planes)
        self.w2 = 0.1 * jax.random.normal(ks[5], (3, 3, planes, planes), jnp.float32)
        self.s2, self.b2 = bn_params(ks[6], ks[7], ks[8], ks[9], planes)
        if self.has_proj:
            self.wsc = 0.1 * jax.random.normal(
                ks[10], (in_planes, self.expansion * planes), jnp.float32)
            self.ssc, self.bsc = bn_params(ks[11], ks[12], ks[13], ks[14],
                                           self.expansion * planes)

    # Bands and tiled BN affines are built once per (H, W) and cached (BN scale is
    # folded into the band weights; only the bias add remains in-kernel).
    def _get_params(self, H, W):
        key = (H, W)
        if key in self._band_cache:
            return self._band_cache[key]
        s = self.stride
        Wo = (W - 1) // s + 1
        F = Wo * self.planes
        s1t = jnp.tile(self.s1, Wo)
        s2t = jnp.tile(self.s2, Wo)
        if s == 1:
            wb1 = _conv3x3_band(self.w1, W, Wo, 1) * s1t           # (3, W*Cin, F)
        else:
            bp, bc = _conv3x3_superrow_bands(self.w1, W, Wo, s)
            wb1 = jnp.stack([bp, bc], axis=0) * s1t                # (2, s*W*Cin, F)
        p = {
            'wb1': wb1,
            'b1': jnp.tile(self.b1, Wo).reshape(1, F),
            'wb2': _conv3x3_band(self.w2, Wo, Wo, 1) * s2t,        # (3, F, F)
            'b2': jnp.tile(self.b2, Wo).reshape(1, F),
        }
        if self.has_proj:
            p['wsc'] = _conv1x1_band(self.wsc, W, Wo, s) * jnp.tile(self.ssc, Wo)
            p['bsc'] = jnp.tile(self.bsc, Wo).reshape(1, F)
        self._band_cache[key] = p
        return p

    def _pick_batch_tile(self, N, R_in, Ho, Kin, F, Wcin, n_b1, n_out):
        def est(b):
            return _step_vmem_bytes(b, R_in, Ho, Kin, F, Wcin, n_b1,
                                    self.has_proj, n_out)
        divisors = [b for b in range(N, 0, -1) if N % b == 0]
        fits = [b for b in divisors if est(b) <= _VMEM_BUDGET] or [1]
        # Prefer >=2 grid steps (v7x megacore split) as long as the per-step M stays
        # MXU-friendly; otherwise maximize the batch tile (the biggest single lever).
        good = [b for b in fits if N // b >= 2 and b * Ho >= 128]
        b_tile = (good or fits)[0]
        vmem_limit = int(min(max(2 * est(b_tile), 32 << 20), 48 << 20))
        return b_tile, vmem_limit

    def __call__(self, x_tuple, return_intermediates=True):
        x_nchw = x_tuple[0]                        # (N, C, H, W), PyTorch layout
        N, Cin, H, W = x_nchw.shape
        s = self.stride
        P = self.planes
        Ho = (H - 1) // s + 1
        Wo = (W - 1) // s + 1
        Wcin = W * Cin
        F = Wo * P

        params = self._get_params(H, W)

        # NCHW -> row-flattened NHWC; for stride>=2, pack `s` image rows per
        # "super-row" along the lane axis (a free reshape on the wrapper side).
        x_nhwc = jnp.transpose(x_nchw, (0, 2, 3, 1))
        if s == 1:
            R_in, Kin = H, Wcin
            xr = x_nhwc.reshape(N, H, Wcin)
        else:
            Hp = Ho * s
            if Hp != H:  # conv's bottom zero-pad row for H not divisible by stride
                x_nhwc = jnp.pad(x_nhwc, ((0, 0), (0, Hp - H), (0, 0), (0, 0)))
            R_in, Kin = Ho, s * Wcin
            xr = x_nhwc.reshape(N, Ho, Kin)

        n_b1 = params['wb1'].shape[0]
        n_out = 3 if return_intermediates else 1
        B_TILE, vmem_limit = self._pick_batch_tile(N, R_in, Ho, Kin, F, Wcin,
                                                   n_b1, n_out)

        inputs = [xr, params['wb1'], params['b1'], params['wb2'], params['b2']]
        in_specs = [
            pl.BlockSpec((B_TILE, R_in, Kin), lambda n: (n, 0, 0)),
            pl.BlockSpec((n_b1, Kin, F), lambda n: (0, 0, 0)),
            pl.BlockSpec((1, F), lambda n: (0, 0)),
            pl.BlockSpec((3, F, F), lambda n: (0, 0, 0)),
            pl.BlockSpec((1, F), lambda n: (0, 0)),
        ]
        if self.has_proj:
            inputs += [params['wsc'], params['bsc']]
            in_specs += [pl.BlockSpec((Wcin, F), lambda n: (0, 0)),
                         pl.BlockSpec((1, F), lambda n: (0, 0))]

        out_block = pl.BlockSpec((B_TILE, Ho, F), lambda n: (n, 0, 0))
        sds = jax.ShapeDtypeStruct((N, Ho, F), xr.dtype)
        if return_intermediates:
            out_shape = (sds, sds, sds)
            out_specs = (out_block, out_block, out_block)
        else:
            out_shape = sds
            out_specs = out_block

        kern = functools.partial(
            _basic_block_kernel, B=B_TILE, R_in=R_in, Ho=Ho, Kin=Kin, F=F,
            Wcin=Wcin, stride=s, has_proj=self.has_proj,
            want_inter=return_intermediates)

        scr1_rows = (R_in + _OFF + 1) if s == 1 else (Ho + _OFF)
        outs = pl.pallas_call(
            kern,
            out_shape=out_shape,
            grid=(N // B_TILE,),
            in_specs=in_specs,
            out_specs=out_specs,
            scratch_shapes=[pltpu.VMEM((B_TILE, scr1_rows, Kin), jnp.float32),
                            pltpu.VMEM((B_TILE, Ho + _OFF + 1, F), jnp.float32)],
            compiler_params=pltpu.CompilerParams(
                dimension_semantics=("parallel",),
                vmem_limit_bytes=vmem_limit),
        )(*inputs)

        def to_nchw(o):                            # (N, Ho, Wo*P) -> (N, P, Ho, Wo)
            return jnp.transpose(o.reshape(N, Ho, Wo, P), (0, 3, 1, 2))

        if return_intermediates:
            o1, o2, o3 = outs
            results = {
                str(self.id) + '0': to_nchw(o1),
                str(self.id) + '1': to_nchw(o2),
                str(self.id) + '2': to_nchw(o3),
            }
            return to_nchw(o3), results
        return to_nchw(outs), {}


# ------------------------------------------------------------------------- reference

def _reference_forward(block, x_nchw):
    """Pure-JAX (lax.conv) reference for correctness checking."""
    dn = ('NHWC', 'HWIO', 'NHWC')
    s = block.stride
    x = jnp.transpose(x_nchw, (0, 2, 3, 1))
    y1 = lax.conv_general_dilated(x, block.w1, (s, s), ((1, 1), (1, 1)),
                                  dimension_numbers=dn)
    y1 = jnp.maximum(y1 * block.s1 + block.b1, 0.0)
    y2 = lax.conv_general_dilated(y1, block.w2, (1, 1), ((1, 1), (1, 1)),
                                  dimension_numbers=dn)
    y2 = y2 * block.s2 + block.b2
    if block.has_proj:
        sc = lax.conv_general_dilated(x, block.wsc.reshape(1, 1, *block.wsc.shape),
                                      (s, s), ((0, 0), (0, 0)), dimension_numbers=dn)
        sc = sc * block.ssc + block.bsc
    else:
        sc = x
    out = jnp.maximum(y2 + sc, 0.0)
    return jnp.transpose(out, (0, 3, 1, 2))


# ------------------------------------------------------------------------------ main

if __name__ == "__main__":
    key = jax.random.PRNGKey(0)
    k_x, k_p, k_x2, k_p2 = jax.random.split(key, 4)

    # ---- projection shortcut, stride 2 ------------------------------------------
    N, C_IN, H, W = 2, 4, 16, 16
    PLANES, STRIDE = 8, 2
    x = jax.random.normal(k_x, (N, C_IN, H, W), jnp.float32)
    block = BasicBlockPallas(C_IN, PLANES, stride=STRIDE, iden='blk', key=k_p)
    out, results = block((x,))
    out = jax.block_until_ready(out)

    ref = _reference_forward(block, x)
    assert out.shape == (N, PLANES, H // STRIDE, W // STRIDE), out.shape
    assert list(results.keys()) == ['blk0', 'blk1', 'blk2']
    assert results['blk0'].shape == (N, PLANES, H // STRIDE, W // STRIDE)
    err = float(jnp.max(jnp.abs(out - ref)))
    assert jnp.allclose(out, ref, atol=2e-4, rtol=2e-4), err

    # fast path: skip the debug intermediates (no o1/o2 HBM writeback)
    out_fast, _ = block((x,), return_intermediates=False)
    out_fast = jax.block_until_ready(out_fast)
    assert jnp.allclose(out_fast, out, atol=1e-5, rtol=1e-5)

    # ---- identity shortcut, stride 1 ---------------------------------------------
    x2 = jax.random.normal(k_x2, (N, PLANES, H, W), jnp.float32)
    block2 = BasicBlockPallas(PLANES, PLANES, stride=1, iden='idn', key=k_p2)
    out2, results2 = block2((x2,))
    out2 = jax.block_until_ready(out2)

    ref2 = _reference_forward(block2, x2)
    assert out2.shape == (N, PLANES, H, W), out2.shape
    assert list(results2.keys()) == ['idn0', 'idn1', 'idn2']
    err2 = float(jnp.max(jnp.abs(out2 - ref2)))
    assert jnp.allclose(out2, ref2, atol=2e-4, rtol=2e-4), err2

    print("KERNEL_OK")
</pallas_src>

<mosaic_0001>
module attributes {stable_mosaic.version = 11 : i64} {
  func.func @_basic_block_kernel(%arg0: i32, %arg1: memref<2x8x128xf32, #tpu.memory_space<vmem>>, %arg2: memref<2x128x64xf32, #tpu.memory_space<vmem>>, %arg3: memref<1x64xf32, #tpu.memory_space<vmem>>, %arg4: memref<3x64x64xf32, #tpu.memory_space<vmem>>, %arg5: memref<1x64xf32, #tpu.memory_space<vmem>>, %arg6: memref<64x64xf32, #tpu.memory_space<vmem>>, %arg7: memref<1x64xf32, #tpu.memory_space<vmem>>, %arg8: memref<2x8x64xf32, #tpu.memory_space<vmem>>, %arg9: memref<2x8x64xf32, #tpu.memory_space<vmem>>, %arg10: memref<2x8x64xf32, #tpu.memory_space<vmem>>, %arg11: memref<2x16x128xf32, #tpu.memory_space<vmem>>, %arg12: memref<2x17x64xf32, #tpu.memory_space<vmem>>) attributes {dimension_semantics = [#tpu.dimension_semantics<parallel>], iteration_bounds = array<i64: 1>, scalar_prefetch = 0 : i64, scratch_operands = 2 : i64, tpu.core_type = #tpu.core_type<tc>, window_params = [{transform_indices = @transform_0, window_bounds = array<i64: 2, 8, 128>}, {pipeline_mode = #tpu.pipeline_mode<synchronous>, transform_indices = @transform_1, window_bounds = array<i64: 2, 128, 64>}, {pipeline_mode = #tpu.pipeline_mode<synchronous>, transform_indices = @transform_2, window_bounds = array<i64: 1, 64>}, {pipeline_mode = #tpu.pipeline_mode<synchronous>, transform_indices = @transform_3, window_bounds = array<i64: 3, 64, 64>}, {pipeline_mode = #tpu.pipeline_mode<synchronous>, transform_indices = @transform_4, window_bounds = array<i64: 1, 64>}, {pipeline_mode = #tpu.pipeline_mode<synchronous>, transform_indices = @transform_5, window_bounds = array<i64: 64, 64>}, {pipeline_mode = #tpu.pipeline_mode<synchronous>, transform_indices = @transform_6, window_bounds = array<i64: 1, 64>}, {transform_indices = @transform_7, window_bounds = array<i64: 2, 8, 64>}, {transform_indices = @transform_8, window_bounds = array<i64: 2, 8, 64>}, {transform_indices = @transform_9, window_bounds = array<i64: 2, 8, 64>}]} {
    %cst = arith.constant 0.000000e+00 : f32
    %0 = vector.broadcast %cst : f32 to vector<2x1x128xf32>
    %c0 = arith.constant 0 : index
    %c7 = arith.constant 7 : index
    %c0_0 = arith.constant 0 : index
    %1 = vector.load %arg11[%c0, %c7, %c0_0] : memref<2x16x128xf32, #tpu.memory_space<vmem>>, vector<2x1x128xf32>
    tpu.vector_store %arg11[%c0, %c7, %c0_0], %0 {strides = array<i32>} : memref<2x16x128xf32, #tpu.memory_space<vmem>>, vector<2x1x128xf32>,
    %c0_1 = arith.constant 0 : index
    %c0_2 = arith.constant 0 : index
    %c0_3 = arith.constant 0 : index
    %2 = vector.load %arg1[%c0_1, %c0_2, %c0_3] : memref<2x8x128xf32, #tpu.memory_space<vmem>>, vector<2x8x128xf32>
    %c0_4 = arith.constant 0 : index
    %c8 = arith.constant 8 : index
    %c0_5 = arith.constant 0 : index
    %3 = vector.load %arg11[%c0_4, %c8, %c0_5] : memref<2x16x128xf32, #tpu.memory_space<vmem>>, vector<2x8x128xf32>
    tpu.vector_store %arg11[%c0_4, %c8, %c0_5], %2 {strides = array<i32>} : memref<2x16x128xf32, #tpu.memory_space<vmem>>, vector<2x8x128xf32>,
    %cst_6 = arith.constant 0.000000e+00 : f32
    %4 = vector.broadcast %cst_6 : f32 to vector<16x64xf32>
    %c0_7 = arith.constant 0 : index
    %c7_8 = arith.constant 7 : index
    %c0_9 = arith.constant 0 : index
    %5 = vector.load %arg11[%c0_7, %c7_8, %c0_9] : memref<2x16x128xf32, #tpu.memory_space<vmem>>, vector<2x8x128xf32>
    %6 = vector.shape_cast %5 : vector<2x8x128xf32> to vector<16x128xf32>
    %c0_10 = arith.constant 0 : index
    %c8_11 = arith.constant 8 : index
    %c0_12 = arith.constant 0 : index
    %7 = vector.load %arg11[%c0_10, %c8_11, %c0_12] : memref<2x16x128xf32, #tpu.memory_space<vmem>>, vector<2x8x128xf32>
    %8 = vector.shape_cast %7 : vector<2x8x128xf32> to vector<16x128xf32>
    %c0_13 = arith.constant 0 : index
    %c0_14 = arith.constant 0 : index
    %c0_15 = arith.constant 0 : index
    %9 = vector.load %arg2[%c0_13, %c0_14, %c0_15] : memref<2x128x64xf32, #tpu.memory_space<vmem>>, vector<1x128x64xf32>
    %10 = vector.shape_cast %9 : vector<1x128x64xf32> to vector<128x64xf32>
    %cst_16 = arith.constant dense<0.000000e+00> : vector<16x64xf32>
    %11 = tpu.matmul %6, %10, %cst_16 {dimension_numbers = #tpu.dot_dimension_numbers<[1], [0], [0], [1], [0, 0, 1, 1], [], []>} : vector<16x128xf32>, vector<128x64xf32>, vector<16x64xf32> -> vector<16x64xf32>
    %12 = arith.addf %4, %11 : vector<16x64xf32>
    %c1 = arith.constant 1 : index
    %c0_17 = arith.constant 0 : index
    %c0_18 = arith.constant 0 : index
    %13 = vector.load %arg2[%c1, %c0_17, %c0_18] : memref<2x128x64xf32, #tpu.memory_space<vmem>>, vector<1x128x64xf32>
    %14 = vector.shape_cast %13 : vector<1x128x64xf32> to vector<128x64xf32>
    %cst_19 = arith.constant dense<0.000000e+00> : vector<16x64xf32>
    %15 = tpu.matmul %8, %14, %cst_19 {dimension_numbers = #tpu.dot_dimension_numbers<[1], [0], [0], [1], [0, 0, 1, 1], [], []>} : vector<16x128xf32>, vector<128x64xf32>, vector<16x64xf32> -> vector<16x64xf32>
    %16 = arith.addf %12, %15 : vector<16x64xf32>
    %17 = vector.extract_strided_slice %8 {offsets = [0, 0], sizes = [16, 64], strides = [1, 1]} : vector<16x128xf32> to vector<16x64xf32>
    %c0_20 = arith.constant 0 : index
    %c0_21 = arith.constant 0 : index
    %18 = vector.load %arg3[%c0_20, %c0_21] : memref<1x64xf32, #tpu.memory_space<vmem>>, vector<1x64xf32>
    %19 = vector.shape_cast %18 : vector<1x64xf32> to vector<64xf32>
    %20 = vector.shape_cast %19 : vector<64xf32> to vector<1x64xf32>
    %21 = vector.broadcast %20 : vector<1x64xf32> to vector<16x64xf32>
    %22 = arith.addf %16, %21 : vector<16x64xf32>
    %cst_22 = arith.constant 0.000000e+00 : f32
    %23 = vector.broadcast %cst_22 : f32 to vector<16x64xf32>
    %24 = arith.maximumf %22, %23 : vector<16x64xf32>
    %25 = vector.shape_cast %24 : vector<16x64xf32> to vector<2x8x64xf32>
    %c0_23 = arith.constant 0 : index
    %c0_24 = arith.constant 0 : index
    %c0_25 = arith.constant 0 : index
    %26 = vector.load %arg8[%c0_23, %c0_24, %c0_25] : memref<2x8x64xf32, #tpu.memory_space<vmem>>, vector<2x8x64xf32>
    tpu.vector_store %arg8[%c0_23, %c0_24, %c0_25], %25 {strides = array<i32>} : memref<2x8x64xf32, #tpu.memory_space<vmem>>, vector<2x8x64xf32>,
    %cst_26 = arith.constant 0.000000e+00 : f32
    %27 = vector.broadcast %cst_26 : f32 to vector<2x1x64xf32>
    %c0_27 = arith.constant 0 : index
    %c7_28 = arith.constant 7 : index
    %c0_29 = arith.constant 0 : index
    %28 = vector.load %arg12[%c0_27, %c7_28, %c0_29] : memref<2x17x64xf32, #tpu.memory_space<vmem>>, vector<2x1x64xf32>
    tpu.vector_store %arg12[%c0_27, %c7_28, %c0_29], %27 {strides = array<i32>} : memref<2x17x64xf32, #tpu.memory_space<vmem>>, vector<2x1x64xf32>,
    %c0_30 = arith.constant 0 : index
    %c16 = arith.constant 16 : index
    %c0_31 = arith.constant 0 : index
    %29 = vector.load %arg12[%c0_30, %c16, %c0_31] : memref<2x17x64xf32, #tpu.memory_space<vmem>>, vector<2x1x64xf32>
    tpu.vector_store %arg12[%c0_30, %c16, %c0_31], %27 {strides = array<i32>} : memref<2x17x64xf32, #tpu.memory_space<vmem>>, vector<2x1x64xf32>,
    %30 = vector.shape_cast %24 : vector<16x64xf32> to vector<2x8x64xf32>
    %c0_32 = arith.constant 0 : index
    %c8_33 = arith.constant 8 : index
    %c0_34 = arith.constant 0 : index
    %31 = vector.load %arg12[%c0_32, %c8_33, %c0_34] : memref<2x17x64xf32, #tpu.memory_space<vmem>>, vector<2x8x64xf32>
    tpu.vector_store %arg12[%c0_32, %c8_33, %c0_34], %30 {strides = array<i32>} : memref<2x17x64xf32, #tpu.memory_space<vmem>>, vector<2x8x64xf32>,
    %cst_35 = arith.constant 0.000000e+00 : f32
    %32 = vector.broadcast %cst_35 : f32 to vector<16x64xf32>
    %c0_36 = arith.constant 0 : index
    %c7_37 = arith.constant 7 : index
    %c0_38 = arith.constant 0 : index
    %33 = vector.load %arg12[%c0_36, %c7_37, %c0_38] : memref<2x17x64xf32, #tpu.memory_space<vmem>>, vector<2x8x64xf32>
    %34 = vector.shape_cast %33 : vector<2x8x64xf32> to vector<16x64xf32>
    %c0_39 = arith.constant 0 : index
    %c0_40 = arith.constant 0 : index
    %c0_41 = arith.constant 0 : index
    %35 = vector.load %arg4[%c0_39, %c0_40, %c0_41] : memref<3x64x64xf32, #tpu.memory_space<vmem>>, vector<1x64x64xf32>
    %36 = vector.shape_cast %35 : vector<1x64x64xf32> to vector<64x64xf32>
    %cst_42 = arith.constant dense<0.000000e+00> : vector<16x64xf32>
    %37 = tpu.matmul %34, %36, %cst_42 {dimension_numbers = #tpu.dot_dimension_numbers<[1], [0], [0], [1], [0, 0, 1, 1], [], []>} : vector<16x64xf32>, vector<64x64xf32>, vector<16x64xf32> -> vector<16x64xf32>
    %38 = arith.addf %32, %37 : vector<16x64xf32>
    %c0_43 = arith.constant 0 : index
    %c8_44 = arith.constant 8 : index
    %c0_45 = arith.constant 0 : index
    %39 = vector.load %arg12[%c0_43, %c8_44, %c0_45] : memref<2x17x64xf32, #tpu.memory_space<vmem>>, vector<2x8x64xf32>
    %40 = vector.shape_cast %39 : vector<2x8x64xf32> to vector<16x64xf32>
    %c1_46 = arith.constant 1 : index
    %c0_47 = arith.constant 0 : index
    %c0_48 = arith.constant 0 : index
    %41 = vector.load %arg4[%c1_46, %c0_47, %c0_48] : memref<3x64x64xf32, #tpu.memory_space<vmem>>, vector<1x64x64xf32>
    %42 = vector.shape_cast %41 : vector<1x64x64xf32> to vector<64x64xf32>
    %cst_49 = arith.constant dense<0.000000e+00> : vector<16x64xf32>
    %43 = tpu.matmul %40, %42, %cst_49 {dimension_numbers = #tpu.dot_dimension_numbers<[1], [0], [0], [1], [0, 0, 1, 1], [], []>} : vector<16x64xf32>, vector<64x64xf32>, vector<16x64xf32> -> vector<16x64xf32>
    %44 = arith.addf %38, %43 : vector<16x64xf32>
    %c0_50 = arith.constant 0 : index
    %c9 = arith.constant 9 : index
    %c0_51 = arith.constant 0 : index
    %45 = vector.load %arg12[%c0_50, %c9, %c0_51] : memref<2x17x64xf32, #tpu.memory_space<vmem>>, vector<2x8x64xf32>
    %46 = vector.shape_cast %45 : vector<2x8x64xf32> to vector<16x64xf32>
    %c2 = arith.constant 2 : index
    %c0_52 = arith.constant 0 : index
    %c0_53 = arith.constant 0 : index
    %47 = vector.load %arg4[%c2, %c0_52, %c0_53] : memref<3x64x64xf32, #tpu.memory_space<vmem>>, vector<1x64x64xf32>
    %48 = vector.shape_cast %47 : vector<1x64x64xf32> to vector<64x64xf32>
    %cst_54 = arith.constant dense<0.000000e+00> : vector<16x64xf32>
    %49 = tpu.matmul %46, %48, %cst_54 {dimension_numbers = #tpu.dot_dimension_numbers<[1], [0], [0], [1], [0, 0, 1, 1], [], []>} : vector<16x64xf32>, vector<64x64xf32>, vector<16x64xf32> -> vector<16x64xf32>
    %50 = arith.addf %44, %49 : vector<16x64xf32>
    %c0_55 = arith.constant 0 : index
    %c0_56 = arith.constant 0 : index
    %51 = vector.load %arg5[%c0_55, %c0_56] : memref<1x64xf32, #tpu.memory_space<vmem>>, vector<1x64xf32>
    %52 = vector.shape_cast %51 : vector<1x64xf32> to vector<64xf32>
    %53 = vector.shape_cast %52 : vector<64xf32> to vector<1x64xf32>
    %54 = vector.broadcast %53 : vector<1x64xf32> to vector<16x64xf32>
    %55 = arith.addf %50, %54 : vector<16x64xf32>
    %56 = vector.shape_cast %55 : vector<16x64xf32> to vector<2x8x64xf32>
    %c0_57 = arith.constant 0 : index
    %c0_58 = arith.constant 0 : index
    %c0_59 = arith.constant 0 : index
    %57 = vector.load %arg9[%c0_57, %c0_58, %c0_59] : memref<2x8x64xf32, #tpu.memory_space<vmem>>, vector<2x8x64xf32>
    tpu.vector_store %arg9[%c0_57, %c0_58, %c0_59], %56 {strides = array<i32>} : memref<2x8x64xf32, #tpu.memory_space<vmem>>, vector<2x8x64xf32>,
    %c0_60 = arith.constant 0 : index
    %c0_61 = arith.constant 0 : index
    %58 = vector.load %arg6[%c0_60, %c0_61] : memref<64x64xf32, #tpu.memory_space<vmem>>, vector<64x64xf32>
    %cst_62 = arith.constant dense<0.000000e+00> : vector<16x64xf32>
    %59 = tpu.matmul %17, %58, %cst_62 {dimension_numbers = #tpu.dot_dimension_numbers<[1], [0], [0], [1], [0, 0, 1, 1], [], []>} : vector<16x64xf32>, vector<64x64xf32>, vector<16x64xf32> -> vector<16x64xf32>
    %c0_63 = arith.constant 0 : index
    %c0_64 = arith.constant 0 : index
    %60 = vector.load %arg7[%c0_63, %c0_64] : memref<1x64xf32, #tpu.memory_space<vmem>>, vector<1x64xf32>
    %61 = vector.shape_cast %60 : vector<1x64xf32> to vector<64xf32>
    %62 = vector.shape_cast %61 : vector<64xf32> to vector<1x64xf32>
    %63 = vector.broadcast %62 : vector<1x64xf32> to vector<16x64xf32>
    %64 = arith.addf %59, %63 : vector<16x64xf32>
    %65 = arith.addf %55, %64 : vector<16x64xf32>
    %cst_65 = arith.constant 0.000000e+00 : f32
    %66 = vector.broadcast %cst_65 : f32 to vector<16x64xf32>
    %67 = arith.maximumf %65, %66 : vector<16x64xf32>
    %68 = vector.shape_cast %67 : vector<16x64xf32> to vector<2x8x64xf32>
    %c0_66 = arith.constant 0 : index
    %c0_67 = arith.constant 0 : index
    %c0_68 = arith.constant 0 : index
    %69 = vector.load %arg10[%c0_66, %c0_67, %c0_68] : memref<2x8x64xf32, #tpu.memory_space<vmem>>, vector<2x8x64xf32>
    tpu.vector_store %arg10[%c0_66, %c0_67, %c0_68], %68 {strides = array<i32>} : memref<2x8x64xf32, #tpu.memory_space<vmem>>, vector<2x8x64xf32>,
    return
  }
  func.func @transform_0(%arg0: i32) -> (i32, i32, i32) {
    %c0_i32 = arith.constant 0 : i32
    %c0_i32_0 = arith.constant 0 : i32
    %c0_i32_1 = arith.constant 0 : i32
    return %arg0, %c0_i32, %c0_i32_0 : i32, i32, i32
  }
  func.func @transform_1(%arg0: i32) -> (i32, i32, i32) {
    %c0_i32 = arith.constant 0 : i32
    %c0_i32_0 = arith.constant 0 : i32
    %c0_i32_1 = arith.constant 0 : i32
    %c0_i32_2 = arith.constant 0 : i32
    return %c0_i32, %c0_i32_0, %c0_i32_1 : i32, i32, i32
  }
  func.func @transform_2(%arg0: i32) -> (i32, i32) {
    %c0_i32 = arith.constant 0 : i32
    %c0_i32_0 = arith.constant 0 : i32
    %c0_i32_1 = arith.constant 0 : i32
    return %c0_i32, %c0_i32_0 : i32, i32
  }
  func.func @transform_3(%arg0: i32) -> (i32, i32, i32) {
    %c0_i32 = arith.constant 0 : i32
    %c0_i32_0 = arith.constant 0 : i32
    %c0_i32_1 = arith.constant 0 : i32
    %c0_i32_2 = arith.constant 0 : i32
    return %c0_i32, %c0_i32_0, %c0_i32_1 : i32, i32, i32
  }
  func.func @transform_4(%arg0: i32) -> (i32, i32) {
    %c0_i32 = arith.constant 0 : i32
    %c0_i32_0 = arith.constant 0 : i32
    %c0_i32_1 = arith.constant 0 : i32
    return %c0_i32, %c0_i32_0 : i32, i32
  }
  func.func @transform_5(%arg0: i32) -> (i32, i32) {
    %c0_i32 = arith.constant 0 : i32
    %c0_i32_0 = arith.constant 0 : i32
    %c0_i32_1 = arith.constant 0 : i32
    return %c0_i32, %c0_i32_0 : i32, i32
  }
  func.func @transform_6(%arg0: i32) -> (i32, i32) {
    %c0_i32 = arith.constant 0 : i32
    %c0_i32_0 = arith.constant 0 : i32
    %c0_i32_1 = arith.constant 0 : i32
    return %c0_i32, %c0_i32_0 : i32, i32
  }
  func.func @transform_7(%arg0: i32) -> (i32, i32, i32) {
    %c0_i32 = arith.constant 0 : i32
    %c0_i32_0 = arith.constant 0 : i32
    %c0_i32_1 = arith.constant 0 : i32
    return %arg0, %c0_i32, %c0_i32_0 : i32, i32, i32
  }
  func.func @transform_8(%arg0: i32) -> (i32, i32, i32) {
    %c0_i32 = arith.constant 0 : i32
    %c0_i32_0 = arith.constant 0 : i32
    %c0_i32_1 = arith.constant 0 : i32
    return %arg0, %c0_i32, %c0_i32_0 : i32, i32, i32
  }
  func.func @transform_9(%arg0: i32) -> (i32, i32, i32) {
    %c0_i32 = arith.constant 0 : i32
    %c0_i32_0 = arith.constant 0 : i32
    %c0_i32_1 = arith.constant 0 : i32
    return %arg0, %c0_i32, %c0_i32_0 : i32, i32, i32
  }
}

</mosaic_0001>

<llo_original>
// kernel: tpu_custom_call.1
$region0: #{tpu_custom_call.1}
  #allocation0 [shape = 'u32[]', space=smem, size = 0x4, offset = 0x4, fixed_abs, tag = 'smem constant byte address 0x4 - core index']
  #allocation1 [shape = 'u32[72,128]{1,0:T(1,128)}', space=vmem, size = 0x9000, scoped, tag = 'internal scratch']
  #allocation2 [shape = 'f32[2,16,128]{2,1,0:T(8,128)}', space=vmem, size = 0x4000, scoped, tag = 'scratch operand']
  #allocation3 [shape = 'f32[2,17,64]{2,1,0:T(8,128)}', space=vmem, size = 0x6000, scoped, tag = 'scratch operand']
  %s0 = inlined_call_operand.vmem [shape: f32[2,8,128], index: 0, kind: input, shape index: {}]
  %s1 = inlined_call_operand.vmem [shape: f32[2,128,64], index: 1, kind: input, shape index: {}]
  %s2 = inlined_call_operand.vmem [shape: f32[1,64], index: 2, kind: input, shape index: {}]
  %s3 = inlined_call_operand.vmem [shape: f32[3,64,64], index: 3, kind: input, shape index: {}]
  %s4 = inlined_call_operand.vmem [shape: f32[1,64], index: 4, kind: input, shape index: {}]
  %s5 = inlined_call_operand.vmem [shape: f32[64,64], index: 5, kind: input, shape index: {}]
  %s6 = inlined_call_operand.vmem [shape: f32[1,64], index: 6, kind: input, shape index: {}]
  %s7 = inlined_call_operand.hbm [shape: f32[2,8,64], index: 7, kind: output, shape index: {0}]
  %s8 = inlined_call_operand.hbm [shape: f32[2,8,64], index: 8, kind: output, shape index: {1}]
  %s9 = inlined_call_operand.hbm [shape: f32[2,8,64], index: 9, kind: output, shape index: {2}]
  %10 = xla_tuple %s7, %s8, %s9
  %s11 = sld [smem:[#allocation0]]
  $region54: #{tpu_custom_call.1} parent=0
    _
  %s13 = ssub.s32 1, %s11
  %s14 = scalar_select 0, %s13, %s11
  $region1: #{tpu_custom_call.1} parent=0
    #allocation4 [shape = 'u8[8192]{0}', space=vmem, size = 0x2000, scoped, tag = 'output window, operand 0, single buffered']
    #allocation5 [shape = 's32[1]{0}', space=sflag, size = 0x4, scoped, tag = 'scoped memory for tpu_custom_call.1']
    #allocation6 [shape = 'u8[8192]{0}', space=vmem, size = 0x2000, scoped, tag = 'output window, operand 1, single buffered']
    #allocation7 [shape = 's32[1]{0}', space=sflag, size = 0x4, scoped, tag = 'scoped memory for tpu_custom_call.1']
    #allocation8 [shape = 'u8[8192]{0}', space=vmem, size = 0x2000, scoped, tag = 'output window, operand 2, single buffered']
    %15 = vsyncpa [#allocation5], 0
    %16 = vsyncpa [#allocation7], 0
    // Predicated region
    $region2: #{tpu_custom_call.1} parent=1 // pred_check
      _
    $region3: #{tpu_custom_call.1} parent=1 // pred_check_branch
      %18 = sbr.rel (0) target = $region5
    $region4: #{tpu_custom_call.1} parent=1 // pred_region
      _
    $region5: #{tpu_custom_call.1} parent=1 // pred_fallthru
      _
    // Predicated region
    $region6: #{tpu_custom_call.1} parent=1 // pred_check
      _
    $region7: #{tpu_custom_call.1} parent=1 // pred_check_branch
      %20 = sbr.rel (0) target = $region9
    $region8: #{tpu_custom_call.1} parent=1 // pred_region
      _
    $region9: #{tpu_custom_call.1} parent=1 // pred_fallthru
      _
    // Predicated region
    $region10: #{tpu_custom_call.1} parent=1 // pred_check
      _
    $region11: #{tpu_custom_call.1} parent=1 // pred_check_branch
      %22 = sbr.rel (0) target = $region13
    $region12: #{tpu_custom_call.1} parent=1 // pred_region
      _
    $region13: #{tpu_custom_call.1} parent=1 // pred_fallthru
      _
    // Predicated region
    $region14: #{tpu_custom_call.1} parent=1 // pred_check
      _
    $region15: #{tpu_custom_call.1} parent=1 // pred_check_branch
      %24 = sbr.rel (0) target = $region17
    $region16: #{tpu_custom_call.1} parent=1 // pred_region
      _
    $region17: #{tpu_custom_call.1} parent=1 // pred_fallthru
      _
    // Predicated region
    $region18: #{tpu_custom_call.1} parent=1 // pred_check
      _
    $region19: #{tpu_custom_call.1} parent=1 // pred_check_branch
      %26 = sbr.rel (0) target = $region21
    $region20: #{tpu_custom_call.1} parent=1 // pred_region
      _
    $region21: #{tpu_custom_call.1} parent=1 // pred_fallthru
      _
    // Predicated region
    $region22: #{tpu_custom_call.1} parent=1 // pred_check
      _
    $region23: #{tpu_custom_call.1} parent=1 // pred_check_branch
      %28 = sbr.rel (0) target = $region25
    $region24: #{tpu_custom_call.1} parent=1 // pred_region
      _
    $region25: #{tpu_custom_call.1} parent=1 // pred_fallthru
      _
    // Predicated region
    $region26: #{tpu_custom_call.1} parent=1 // pred_check
      _
    $region27: #{tpu_custom_call.1} parent=1 // pred_check_branch
      %30 = sbr.rel (0) target = $region29
    $region28: #{tpu_custom_call.1} parent=1 // pred_region
      _
    $region29: #{tpu_custom_call.1} parent=1 // pred_fallthru
      _
    %31 = vst [vmem:[#allocation2 + $0x7] sm:$0x1] 0.0
    %32 = vst [vmem:[#allocation2 + $0x17] sm:$0x1] 0.0
    %v33 = vld [vmem:[%s0] sm:$0xff]
    %v34 = vld [vmem:[%s0 + $0x8] sm:$0xff]
    %35 = vst [vmem:[#allocation2 + $0x8] sm:$0xff] %v33
    %36 = vst [vmem:[#allocation2 + $0x18] sm:$0xff] %v34
    %v37 = vld [vmem:[#allocation2 + $0x7] sm:$0xff]
    %v38 = vld [vmem:[#allocation2 + $0x17] sm:$0xff]
    %v39 = vld [vmem:[#allocation2 + $0x8] sm:$0xff]
    %v40 = vld [vmem:[#allocation2 + $0x18] sm:$0xff]
    %v41 = vld [vmem:[%s1] sm:$0xff]
    %v42 = vld [vmem:[%s1 + $0x8] sm:$0xff]
    %v43 = vld [vmem:[%s1 + $0x10] sm:$0xff]
    %v44 = vld [vmem:[%s1 + $0x18] sm:$0xff]
    %v45 = vld [vmem:[%s1 + $0x20] sm:$0xff]
    %v46 = vld [vmem:[%s1 + $0x28] sm:$0xff]
    %v47 = vld [vmem:[%s1 + $0x30] sm:$0xff]
    %v48 = vld [vmem:[%s1 + $0x38] sm:$0xff]
    %v49 = vld [vmem:[%s1 + $0x40] sm:$0xff]
    %v50 = vld [vmem:[%s1 + $0x48] sm:$0xff]
    %v51 = vld [vmem:[%s1 + $0x50] sm:$0xff]
    %v52 = vld [vmem:[%s1 + $0x58] sm:$0xff]
    %v53 = vld [vmem:[%s1 + $0x60] sm:$0xff]
    %v54 = vld [vmem:[%s1 + $0x68] sm:$0xff]
    %v55 = vld [vmem:[%s1 + $0x70] sm:$0xff]
    %v56 = vld [vmem:[%s1 + $0x78] sm:$0xff]
    %s57 = scalar_lea.vmem %s1, 128
    %v58 = vld [vmem:[%s57] sm:$0xff]
    %v59 = vld [vmem:[%s57 + $0x8] sm:$0xff]
    %v60 = vld [vmem:[%s57 + $0x10] sm:$0xff]
    %v61 = vld [vmem:[%s57 + $0x18] sm:$0xff]
    %v62 = vld [vmem:[%s57 + $0x20] sm:$0xff]
    %v63 = vld [vmem:[%s57 + $0x28] sm:$0xff]
    %v64 = vld [vmem:[%s57 + $0x30] sm:$0xff]
    %v65 = vld [vmem:[%s57 + $0x38] sm:$0xff]
    %v66 = vld [vmem:[%s57 + $0x40] sm:$0xff]
    %v67 = vld [vmem:[%s57 + $0x48] sm:$0xff]
    %v68 = vld [vmem:[%s57 + $0x50] sm:$0xff]
    %v69 = vld [vmem:[%s57 + $0x58] sm:$0xff]
    %v70 = vld [vmem:[%s57 + $0x60] sm:$0xff]
    %v71 = vld [vmem:[%s57 + $0x68] sm:$0xff]
    %v72 = vld [vmem:[%s57 + $0x70] sm:$0xff]
    %v73 = vld [vmem:[%s57 + $0x78] sm:$0xff]
    %74 = vmatpush.msra.mxu0 %v73
    %75 = vmatpush.msra.mxu0 %v72
    %76 = vmatpush.msra.mxu0 %v71
    %77 = vmatpush.msra.mxu0 %v70
    %78 = vmatpush.msra.mxu0 %v69
    %79 = vmatpush.msra.mxu0 %v68
    %80 = vmatpush.msra.mxu0 %v67
    %81 = vmatpush.msra.mxu0 %v66
    %82 = vmatpush.msra.mxu0 %v65
    %83 = vmatpush.msra.mxu0 %v64
    %84 = vmatpush.msra.mxu0 %v63
    %85 = vmatpush.msra.mxu0 %v62
    %86 = vmatpush.msra.mxu0 %v61
    %87 = vmatpush.msra.mxu0 %v60
    %88 = vmatpush.msra.mxu0 %v59
    %89 = vmatpush.msra.mxu0 %v58
    %90 = vmatmul.f32.gmra.mxu0 %v39
    %v91 = vpop.f32.mrf.mxu0
    %v92 = vadd.f32 0.0, %v91
    %93 = vmatmul.f32.gmra.mxu0 %v40
    %v94 = vpop.f32.mrf.mxu0
    %v95 = vadd.f32 0.0, %v94
    %96 = vdwg.mxu0
    %97 = vmatpush.msra.mxu0 %v56
    %98 = vmatpush.msra.mxu0 %v55
    %99 = vmatpush.msra.mxu0 %v54
    %100 = vmatpush.msra.mxu0 %v53
    %101 = vmatpush.msra.mxu0 %v52
    %102 = vmatpush.msra.mxu0 %v51
    %103 = vmatpush.msra.mxu0 %v50
    %104 = vmatpush.msra.mxu0 %v49
    %105 = vmatpush.msra.mxu0 %v48
    %106 = vmatpush.msra.mxu0 %v47
    %107 = vmatpush.msra.mxu0 %v46
    %108 = vmatpush.msra.mxu0 %v45
    %109 = vmatpush.msra.mxu0 %v44
    %110 = vmatpush.msra.mxu0 %v43
    %111 = vmatpush.msra.mxu0 %v42
    %112 = vmatpush.msra.mxu0 %v41
    %113 = vmatmul.f32.gmra.mxu0 %v37
    %v114 = vpop.f32.mrf.mxu0
    %v115 = vadd.f32 %v92, %v114
    %116 = vmatmul.f32.gmra.mxu0 %v38
    %v117 = vpop.f32.mrf.mxu0
    %v118 = vadd.f32 %v95, %v117
    %119 = vdwg.mxu0
    %v120 = vld [vmem:[%s2] sm:$0x1]
    %v122 = vperm.slane %v120, 0
    %v124 = vadd.f32 %v115, %v122
    %v125 = vadd.f32 %v118, %v122
    %v126 = vmax.f32 %v124, 0.0
    %v127 = vmax.f32 %v125, 0.0
    %vm128 = vcmask 523264
    %129 = vst.msk [vmem:[#allocation4] sm:$0xff] %vm128, %v126
    %130 = vst.msk [vmem:[#allocation4 + $0x8] sm:$0xff] %vm128, %v127
    %vm131 = vcmask 516096
    %132 = vst.msk [vmem:[#allocation3 + $0x7] sm:$0x1] %vm131, 0.0
    %133 = vst.msk [vmem:[#allocation3 + $0x1f] sm:$0x1] %vm131, 0.0
    %134 = vst.msk [vmem:[#allocation3 + $0x10] sm:$0x1] %vm131, 0.0
    %135 = vst.msk [vmem:[#allocation3 + $0x28] sm:$0x1] %vm131, 0.0
    %136 = vst.msk [vmem:[#allocation3 + $0x8] sm:$0xff] %vm128, %v126
    %137 = vst.msk [vmem:[#allocation3 + $0x20] sm:$0xff] %vm128, %v127
    %v138 = vld [vmem:[#allocation3 + $0x7] sm:$0xff]
    %v139 = vld [vmem:[#allocation3 + $0x1f] sm:$0xff]
    %v140 = vld [vmem:[%s3] sm:$0xff]
    %v141 = vld [vmem:[%s3 + $0x8] sm:$0xff]
    %v142 = vld [vmem:[%s3 + $0x10] sm:$0xff]
    %v143 = vld [vmem:[%s3 + $0x18] sm:$0xff]
    %v144 = vld [vmem:[%s3 + $0x20] sm:$0xff]
    %v145 = vld [vmem:[%s3 + $0x28] sm:$0xff]
    %v146 = vld [vmem:[%s3 + $0x30] sm:$0xff]
    %v147 = vld [vmem:[%s3 + $0x38] sm:$0xff]
    %v148 = vld [vmem:[#allocation3 + $0x8] sm:$0xff]
    %v149 = vld [vmem:[#allocation3 + $0x20] sm:$0xff]
    %s150 = scalar_lea.vmem %s3, 64
    %v151 = vld [vmem:[%s150] sm:$0xff]
    %v152 = vld [vmem:[%s150 + $0x8] sm:$0xff]
    %v153 = vld [vmem:[%s150 + $0x10] sm:$0xff]
    %v154 = vld [vmem:[%s150 + $0x18] sm:$0xff]
    %v155 = vld [vmem:[%s150 + $0x20] sm:$0xff]
    %v156 = vld [vmem:[%s150 + $0x28] sm:$0xff]
    %v157 = vld [vmem:[%s150 + $0x30] sm:$0xff]
    %v158 = vld [vmem:[%s150 + $0x38] sm:$0xff]
    %v160 = vsel %vm128, %v148, 0
    %v163 = vsel %vm128, %v149, 0
    %165 = vmatpush.msra.mxu0 0.0
    %166 = vmatpush.msra.mxu0 0.0
    %167 = vmatpush.msra.mxu0 0.0
    %168 = vmatpush.msra.mxu0 0.0
    %169 = vmatpush.msra.mxu0 0.0
    %170 = vmatpush.msra.mxu0 0.0
    %171 = vmatpush.msra.mxu0 0.0
    %172 = vmatpush.msra.mxu0 0.0
    %173 = vmatpush.msra.mxu0 %v158
    %174 = vmatpush.msra.mxu0 %v157
    %175 = vmatpush.msra.mxu0 %v156
    %176 = vmatpush.msra.mxu0 %v155
    %177 = vmatpush.msra.mxu0 %v154
    %178 = vmatpush.msra.mxu0 %v153
    %179 = vmatpush.msra.mxu0 %v152
    %180 = vmatpush.msra.mxu0 %v151
    %181 = vmatmul.f32.gmra.mxu0 %v160
    %v182 = vpop.f32.mrf.mxu0
    %v183 = vadd.f32 0.0, %v182
    %184 = vmatmul.f32.gmra.mxu0 %v163
    %v185 = vpop.f32.mrf.mxu0
    %v186 = vadd.f32 0.0, %v185
    %187 = vdwg.mxu0
    %v189 = vsel %vm128, %v138, 0
    %v192 = vsel %vm128, %v139, 0
    %194 = vmatpush.msra.mxu0 0.0
    %195 = vmatpush.msra.mxu0 0.0
    %196 = vmatpush.msra.mxu0 0.0
    %197 = vmatpush.msra.mxu0 0.0
    %198 = vmatpush.msra.mxu0 0.0
    %199 = vmatpush.msra.mxu0 0.0
    %200 = vmatpush.msra.mxu0 0.0
    %201 = vmatpush.msra.mxu0 0.0
    %202 = vmatpush.msra.mxu0 %v147
    %203 = vmatpush.msra.mxu0 %v146
    %204 = vmatpush.msra.mxu0 %v145
    %205 = vmatpush.msra.mxu0 %v144
    %206 = vmatpush.msra.mxu0 %v143
    %207 = vmatpush.msra.mxu0 %v142
    %208 = vmatpush.msra.mxu0 %v141
    %209 = vmatpush.msra.mxu0 %v140
    %210 = vmatmul.f32.gmra.mxu0 %v189
    %v211 = vpop.f32.mrf.mxu0
    %v212 = vadd.f32 %v183, %v211
    %213 = vmatmul.f32.gmra.mxu0 %v192
    %v214 = vpop.f32.mrf.mxu0
    %v215 = vadd.f32 %v186, %v214
    %216 = vdwg.mxu0
    %v217 = vld [vmem:[#allocation3 + $0x9] sm:$0xff]
    %v218 = vld [vmem:[#allocation3 + $0x21] sm:$0xff]
    %s219 = scalar_lea.vmem %s3, 128
    %v220 = vld [vmem:[%s219] sm:$0xff]
    %v221 = vld [vmem:[%s219 + $0x8] sm:$0xff]
    %v222 = vld [vmem:[%s219 + $0x10] sm:$0xff]
    %v223 = vld [vmem:[%s219 + $0x18] sm:$0xff]
    %v224 = vld [vmem:[%s219 + $0x20] sm:$0xff]
    %v225 = vld [vmem:[%s219 + $0x28] sm:$0xff]
    %v226 = vld [vmem:[%s219 + $0x30] sm:$0xff]
    %v227 = vld [vmem:[%s219 + $0x38] sm:$0xff]
    %v229 = vsel %vm128, %v217, 0
    %v232 = vsel %vm128, %v218, 0
    %234 = vmatpush.msra.mxu0 0.0
    %235 = vmatpush.msra.mxu0 0.0
    %236 = vmatpush.msra.mxu0 0.0
    %237 = vmatpush.msra.mxu0 0.0
    %238 = vmatpush.msra.mxu0 0.0
    %239 = vmatpush.msra.mxu0 0.0
    %240 = vmatpush.msra.mxu0 0.0
    %241 = vmatpush.msra.mxu0 0.0
    %242 = vmatpush.msra.mxu0 %v227
    %243 = vmatpush.msra.mxu0 %v226
    %244 = vmatpush.msra.mxu0 %v225
    %245 = vmatpush.msra.mxu0 %v224
    %246 = vmatpush.msra.mxu0 %v223
    %247 = vmatpush.msra.mxu0 %v222
    %248 = vmatpush.msra.mxu0 %v221
    %249 = vmatpush.msra.mxu0 %v220
    %250 = vmatmul.f32.gmra.mxu0 %v229
    %v251 = vpop.f32.mrf.mxu0
    %v252 = vadd.f32 0.0, %v251
    %253 = vmatmul.f32.gmra.mxu0 %v232
    %v254 = vpop.f32.mrf.mxu0
    %v255 = vadd.f32 0.0, %v254
    %256 = vdwg.mxu0
    %v257 = vadd.f32 %v212, %v252
    %v258 = vadd.f32 %v215, %v255
    %v259 = vld [vmem:[%s4] sm:$0x1]
    %v261 = vperm.slane %v259, 0
    %v263 = vadd.f32 %v257, %v261
    %v264 = vadd.f32 %v258, %v261
    %265 = vst.msk [vmem:[#allocation6] sm:$0xff] %vm128, %v263
    %266 = vst.msk [vmem:[#allocation6 + $0x8] sm:$0xff] %vm128, %v264
    %v267 = vld [vmem:[%s5] sm:$0xff]
    %v268 = vld [vmem:[%s5 + $0x8] sm:$0xff]
    %v269 = vld [vmem:[%s5 + $0x10] sm:$0xff]
    %v270 = vld [vmem:[%s5 + $0x18] sm:$0xff]
    %v271 = vld [vmem:[%s5 + $0x20] sm:$0xff]
    %v272 = vld [vmem:[%s5 + $0x28] sm:$0xff]
    %v273 = vld [vmem:[%s5 + $0x30] sm:$0xff]
    %v274 = vld [vmem:[%s5 + $0x38] sm:$0xff]
    %v275 = vld [vmem:[%s6] sm:$0x1]
    %v277 = vperm.slane %v275, 0
    %v280 = vsel %vm128, %v39, 0
    %v283 = vsel %vm128, %v40, 0
    %285 = vmatpush.msra.mxu0 0.0
    %286 = vmatpush.msra.mxu0 0.0
    %287 = vmatpush.msra.mxu0 0.0
    %288 = vmatpush.msra.mxu0 0.0
    %289 = vmatpush.msra.mxu0 0.0
    %290 = vmatpush.msra.mxu0 0.0
    %291 = vmatpush.msra.mxu0 0.0
    %292 = vmatpush.msra.mxu0 0.0
    %293 = vmatpush.msra.mxu0 %v274
    %294 = vmatpush.msra.mxu0 %v273
    %295 = vmatpush.msra.mxu0 %v272
    %296 = vmatpush.msra.mxu0 %v271
    %297 = vmatpush.msra.mxu0 %v270
    %298 = vmatpush.msra.mxu0 %v269
    %299 = vmatpush.msra.mxu0 %v268
    %300 = vmatpush.msra.mxu0 %v267
    %301 = vmatmul.f32.gmra.mxu0 %v280
    %v302 = vpop.f32.mrf.mxu0
    %v303 = vadd.f32 %v277, %v302
    %304 = vmatmul.f32.gmra.mxu0 %v283
    %v305 = vpop.f32.mrf.mxu0
    %v306 = vadd.f32 %v277, %v305
    %307 = vdwg.mxu0
    %v308 = vadd.f32 %v263, %v303
    %v309 = vadd.f32 %v264, %v306
    %v310 = vmax.f32 %v308, 0.0
    %v311 = vmax.f32 %v309, 0.0
    %312 = vst.msk [vmem:[#allocation8] sm:$0xff] %vm128, %v310
    %313 = vst.msk [vmem:[#allocation8 + $0x8] sm:$0xff] %vm128, %v311
    // Predicated region
    $region30: #{tpu_custom_call.1} parent=1 // pred_check
      _
    $region31: #{tpu_custom_call.1} parent=1 // pred_check_branch
      %315 = sbr.rel (0) target = $region33
    $region32: #{tpu_custom_call.1} parent=1 // pred_region
      %317 = vsyncadd [#allocation5], 0
      %s318 = sshll.u32 [#allocation4], 4
      %s319 = int_to_ptr.vmem [resolvable:$true] %s318
      %s320 = sshll.u32 %s7, 4
      %s321 = int_to_ptr.hbm [resolvable:$true] %s320
      %326 = dma.vmem_to_hbm [thread:$0]  %s319, 256, %s321, [#allocation5], 128, 128, 8
    $region33: #{tpu_custom_call.1} parent=1 // pred_fallthru
      _
    // Predicated region
    $region34: #{tpu_custom_call.1} parent=1 // pred_check
      _
    $region35: #{tpu_custom_call.1} parent=1 // pred_check_branch
      %328 = sbr.rel (0) target = $region37
    $region36: #{tpu_custom_call.1} parent=1 // pred_region
      %330 = vsyncadd [#allocation7], 0
      %s331 = sshll.u32 [#allocation6], 4
      %s332 = int_to_ptr.vmem [resolvable:$true] %s331
      %s333 = sshll.u32 %s8, 4
      %s334 = int_to_ptr.hbm [resolvable:$true] %s333
      %339 = dma.vmem_to_hbm [thread:$0]  %s332, 256, %s334, [#allocation7], 128, 128, 8
    $region37: #{tpu_custom_call.1} parent=1 // pred_fallthru
      _
    // Predicated region
    $region38: #{tpu_custom_call.1} parent=1 // pred_check
      _
    $region39: #{tpu_custom_call.1} parent=1 // pred_check_branch
      %341 = sbr.rel (0) target = $region41
    $region40: #{tpu_custom_call.1} parent=1 // pred_region
      %343 = vsyncadd [#allocation7], 0
      %s344 = sshll.u32 [#allocation8], 4
      %s345 = int_to_ptr.vmem [resolvable:$true] %s344
      %s346 = sshll.u32 %s9, 4
      %s347 = int_to_ptr.hbm [resolvable:$true] %s346
      %352 = dma.vmem_to_hbm [thread:$0]  %s345, 256, %s347, [#allocation7], 128, 128, 8
    $region41: #{tpu_custom_call.1} parent=1 // pred_fallthru
      _
    // Predicated region
    $region42: #{tpu_custom_call.1} parent=1 // pred_check
      _
    $region43: #{tpu_custom_call.1} parent=1 // pred_check_branch
      %354 = sbr.rel (0) target = $region45
    $region44: #{tpu_custom_call.1} parent=1 // pred_region
      %356 = dma.done [#allocation5], 256
    $region45: #{tpu_custom_call.1} parent=1 // pred_fallthru
      _
    // Predicated region
    $region46: #{tpu_custom_call.1} parent=1 // pred_check
      _
    $region47: #{tpu_custom_call.1} parent=1 // pred_check_branch
      %358 = sbr.rel (0) target = $region49
    $region48: #{tpu_custom_call.1} parent=1 // pred_region
      %360 = dma.done [#allocation7], 256
    $region49: #{tpu_custom_call.1} parent=1 // pred_fallthru
      _
    // Predicated region
    $region50: #{tpu_custom_call.1} parent=1 // pred_check
      _
    $region51: #{tpu_custom_call.1} parent=1 // pred_check_branch
      %362 = sbr.rel (0) target = $region53
    $region52: #{tpu_custom_call.1} parent=1 // pred_region
      %364 = dma.done [#allocation7], 256
    $region53: #{tpu_custom_call.1} parent=1 // pred_fallthru
      _
    %365 = vsyncpa [#allocation5], 1
    %366 = vsyncpa [#allocation7], 1

</llo_original>
